<compile_context>
chip_gen: v5e
topology: v5e:2x2
jax: 0.10.0
libtpu: 0.0.40
codegen_flags: <defaults>
</compile_context>

<pallas_src>
import functools

import jax
import jax.numpy as jnp
from jax.experimental import pallas as pl
from jax.experimental.pallas import tpu as pltpu

BN_EPS = 1e-5


def _sigmoid(x):
    # Exact sigmoid (exp on the EUP; exact divide) for parity with PyTorch.
    return 1.0 / (1.0 + jnp.exp(-x))


# ---------------------------------------------------------------------------
# Fused kernel: conv + BN + ReLU + maxpool + channel attn + spatial attn +
#               1x1 conv + ReLU.   Everything lives in (channels, pixels).
# ---------------------------------------------------------------------------
def fused_block_kernel(taps_ref, w1t_ref, b1_ref, gamma_ref, beta_ref,
                       wca1t_ref, wca2t_ref, coef_ref, w2t_ref, b2_ref,
                       out_ref, *, n_batch, h2, w2p):
    S = h2 * w2p                        # pooled pixels per sample
    Q = n_batch * S                     # pooled pixels, total (lane axis)
    P = 4 * Q                           # pre-pool pixels, total
    cout = w1t_ref.shape[0]

    # --- dilated 3x3 conv: ONE (Cout, 9*Cin) x (9*Cin, P) matmul, bf16/f32 --
    acc = jnp.dot(w1t_ref[...], taps_ref[...],
                  preferred_element_type=jnp.float32)           # (Cout, P)
    acc = acc + b1_ref[...]

    # --- BatchNorm2d (training-mode batch stats), two-pass, + ReLU ----------
    inv_p = 1.0 / P
    mu = jnp.sum(acc, axis=1, keepdims=True) * inv_p            # (Cout, 1)
    d = acc - mu
    var = jnp.sum(d * d, axis=1, keepdims=True) * inv_p         # biased var
    z = d * jax.lax.rsqrt(var + BN_EPS) * gamma_ref[...] + beta_ref[...]
    z = jnp.maximum(z, 0.0)

    # --- 2x2 maxpool: the 4 window positions are contiguous lane slabs ------
    m = jnp.maximum(jnp.maximum(z[:, 0:Q], z[:, Q:2 * Q]),
                    jnp.maximum(z[:, 2 * Q:3 * Q], z[:, 3 * Q:4 * Q]))  # (Cout, Q)

    # --- channel attention ---------------------------------------------------
    # Per-sample spatial mean/max via static lane slices (segments of length S)
    inv_s = 1.0 / S
    avg_cols, max_cols = [], []
    for n in range(n_batch):
        seg = m[:, n * S:(n + 1) * S]                           # (Cout, S)
        avg_cols.append(jnp.sum(seg, axis=1, keepdims=True) * inv_s)
        max_cols.append(jnp.max(seg, axis=1, keepdims=True))
    avg_p = jnp.concatenate(avg_cols, axis=1)                   # (Cout, N)
    max_p = jnp.concatenate(max_cols, axis=1)                   # (Cout, N)

    def mlp(v):                                                 # (Cout, N) -> (Cout, N)
        h = jnp.dot(wca1t_ref[...], v.astype(jnp.bfloat16),
                    preferred_element_type=jnp.float32)         # (Cr, N)
        h = jnp.maximum(h, 0.0)
        return jnp.dot(wca2t_ref[...], h.astype(jnp.bfloat16),
                       preferred_element_type=jnp.float32)      # (Cout, N)

    ca = _sigmoid(mlp(avg_p) + mlp(max_p))                      # (Cout, N)

    # Apply the per-sample gate: broadcast each sample's (Cout, 1) gate over
    # that sample's S lane columns (no one-hot matmul, no in-kernel iota).
    y_parts = [m[:, n * S:(n + 1) * S] * ca[:, n:n + 1] for n in range(n_batch)]
    y = jnp.concatenate(y_parts, axis=1)                        # (Cout, Q)

    # --- spatial attention: channel mean/max + in-kernel 3x3 conv -----------
    # coef_ref[t, 0/1, q] = (sa conv weight for tap t on the mean/max input)
    #                       * (1 if the tap source pixel is inside the image),
    # so wrapped values at image/sample borders are multiplied by zero.
    inv_c = 1.0 / cout
    avg_c = jnp.sum(y, axis=0, keepdims=True) * inv_c           # (1, Q)
    max_c = jnp.max(y, axis=0, keepdims=True)                   # (1, Q)
    am = jnp.concatenate([avg_c, max_c], axis=0)                # (2, Q) packed

    sa_acc = jnp.zeros((2, Q), jnp.float32)
    t = 0
    for dy in (-1, 0, 1):               # tap order matches ky*3+kx flattening
        for dx in (-1, 0, 1):
            off = dy * w2p + dx         # lane offset of the tap source pixel
            sh = (-off) % Q             # roll so column q sees column q+off
            rolled = am if sh == 0 else pltpu.roll(am, shift=sh, axis=1)
            sa_acc = sa_acc + coef_ref[t] * rolled              # (2, Q)
            t += 1
    sa = _sigmoid(sa_acc[0:1, :] + sa_acc[1:2, :])              # (1, Q)
    y = y * sa

    # --- 1x1 conv + bias + ReLU, lane-dense (Clast, Q) store ----------------
    out = jnp.dot(w2t_ref[...], y.astype(jnp.bfloat16),
                  preferred_element_type=jnp.float32)           # (Clast, Q)
    out_ref[...] = jnp.maximum(out + b2_ref[...], 0.0)


# ---------------------------------------------------------------------------
# Host wrapper (glue in plain JAX: im2col, mask folding, final transpose).
# ---------------------------------------------------------------------------
def stm_renet_blockd_forward(x_nchw, params):
    N, Cin, H, W = x_nchw.shape
    assert H % 2 == 0 and W % 2 == 0, "2x2 maxpool needs even H, W"
    H2, W2 = H // 2, W // 2
    S = H2 * W2
    Q = N * S
    # Lane-dense layout: pooled pixels sit on the 128-lane axis; the maxpool
    # slab boundaries and the (Clast, Q) store need Q % 128 == 0.
    assert Q % 128 == 0, "N * (H/2) * (W/2) must be a multiple of 128"
    # TODO(synk): pad Q to the next multiple of 128 and mask the padded
    # columns in the BN / CA / SA statistics to lift this restriction.
    Cout = params["w1t"].shape[0]
    Clast = params["w2t"].shape[0]

    # im2col for the dilated (dilation=2, pad=2) 3x3 conv, built directly in
    # the transposed (9*Cin, 4*Q) layout the kernel consumes.  Columns are
    # ordered (pool_window_pos, n, i, j); row block t = ky*3+kx, channel c
    # corresponds to PyTorch conv1.weight[o, c, ky, kx].
    x = jnp.transpose(x_nchw, (0, 2, 3, 1)).astype(jnp.float32)      # NHWC
    x_pad = jnp.pad(x, ((0, 0), (2, 2), (2, 2), (0, 0)))
    tap_rows = []
    for ky in range(3):
        for kx in range(3):
            slabs = []
            for dy, dx in ((0, 0), (0, 1), (1, 0), (1, 1)):
                sl = x_pad[:, dy + 2 * ky: dy + 2 * ky + 2 * H2: 2,
                              dx + 2 * kx: dx + 2 * kx + 2 * W2: 2, :]  # (N,H2,W2,Cin)
                slabs.append(jnp.transpose(sl, (3, 0, 1, 2)).reshape(Cin, Q))
            tap_rows.append(jnp.concatenate(slabs, axis=1))            # (Cin, 4Q)
    taps_t = jnp.concatenate(tap_rows, axis=0).astype(jnp.bfloat16)    # (9Cin, 4Q)
    # TODO(synk): for non-toy H*W, gather the taps in-kernel from x_pad (drop
    # the 9x host im2col HBM expansion) and tile the pooled-pixel axis into a
    # 'parallel' grid with cross-tile two-pass BN stats (megacore on v7x).

    # Spatial-attention coefficients: conv weight folded with the
    # inside-image mask.  wsa[c, ky*3+kx] = sa.conv1.weight[0, c, ky, kx]
    # (c=0 -> channel-mean input, c=1 -> channel-max input).
    r = jnp.arange(Q)
    ii = (r // W2) % H2
    jj = r % W2
    masks = []
    for ky in range(3):
        for kx in range(3):
            dy, dx = ky - 1, kx - 1
            ok = ((ii + dy >= 0) & (ii + dy < H2)
                  & (jj + dx >= 0) & (jj + dx < W2))
            masks.append(ok.astype(jnp.float32))
    mask = jnp.stack(masks, axis=0)                                    # (9, Q)
    coef = params["wsa"].T[:, :, None] * mask[:, None, :]              # (9, 2, Q)

    ins = (taps_t,
           params["w1t"].astype(jnp.bfloat16),
           params["b1"], params["gamma"], params["beta"],
           params["wca1t"].astype(jnp.bfloat16),
           params["wca2t"].astype(jnp.bfloat16),
           coef,
           params["w2t"].astype(jnp.bfloat16),
           params["b2"])

    kern = functools.partial(fused_block_kernel, n_batch=N, h2=H2, w2p=W2)
    out_t = pl.pallas_call(
        kern,
        # No grid: one fused step with whole-array VMEM residents, so nothing
        # gets pipeline double-buffered (there is nothing to pipeline).
        in_specs=[pl.BlockSpec(memory_space=pltpu.MemorySpace.VMEM) for _ in ins],
        out_specs=pl.BlockSpec(memory_space=pltpu.MemorySpace.VMEM),
        out_shape=jax.ShapeDtypeStruct((Clast, Q), jnp.float32),
    )(*ins)

    # lane-dense (Clast, Q) -> NCHW
    return out_t.reshape(Clast, N, H2, W2).transpose(1, 0, 2, 3)


# ---------------------------------------------------------------------------
# Deterministic synthetic parameters (no checkpoint).  Weights are stored
# pre-transposed into the (channels-leading) layouts the kernel consumes.
# ---------------------------------------------------------------------------
def make_params(in_channels, out_channels, last_channels, key):
    assert out_channels >= 16, "ChannelAttention2 uses ratio 16"
    ks = jax.random.split(key, 9)
    cr = out_channels // 16                  # ChannelAttention hidden dim
    f32 = jnp.float32
    return {
        # w1t[o, ky*3*Cin + kx*Cin + c] == conv1.weight[o, c, ky, kx]
        "w1t":   (0.10 * jax.random.normal(ks[0], (out_channels, 9 * in_channels))).astype(f32),
        "b1":    (0.05 * jax.random.normal(ks[1], (out_channels, 1))).astype(f32),
        "gamma": (1.0 + 0.10 * jax.random.normal(ks[2], (out_channels, 1))).astype(f32),
        "beta":  (0.05 * jax.random.normal(ks[3], (out_channels, 1))).astype(f32),
        # wca1t[r, c] == ca.fc1.weight[r, c, 0, 0];  wca2t[c, r] == ca.fc2.weight[c, r, 0, 0]
        "wca1t": (0.20 * jax.random.normal(ks[4], (cr, out_channels))).astype(f32),
        "wca2t": (0.20 * jax.random.normal(ks[5], (out_channels, cr))).astype(f32),
        # wsa[c, ky*3+kx] == sa.conv1.weight[0, c, ky, kx]  (c=0 mean, c=1 max)
        "wsa":   (0.20 * jax.random.normal(ks[6], (2, 9))).astype(f32),
        # w2t[o, i] == conv2.weight[o, i, 0, 0]
        "w2t":   (0.10 * jax.random.normal(ks[7], (last_channels, out_channels))).astype(f32),
        "b2":    (0.05 * jax.random.normal(ks[8], (last_channels, 1))).astype(f32),
    }


if __name__ == "__main__":
    N, Cin, H, W = 2, 4, 16, 16
    Cout, Clast = 32, 16                     # out_channels must be >= 16

    key = jax.random.PRNGKey(0)
    pkey, xkey = jax.random.split(key)
    params = make_params(Cin, Cout, Clast, pkey)
    x = jax.random.normal(xkey, (N, Cin, H, W), dtype=jnp.float32)   # NCHW

    fwd = jax.jit(functools.partial(stm_renet_blockd_forward, params=params))
    out = jax.block_until_ready(fwd(x))

    assert out.shape == (N, Clast, H // 2, W // 2)
    assert bool(jnp.all(jnp.isfinite(out)))
    print("KERNEL_OK")
</pallas_src>

<mosaic_0001>
module attributes {stable_mosaic.version = 11 : i64} {
  func.func @fused_block_kernel(%arg0: memref<36x512xbf16, #tpu.memory_space<vmem>>, %arg1: memref<32x36xbf16, #tpu.memory_space<vmem>>, %arg2: memref<32x1xf32, #tpu.memory_space<vmem>>, %arg3: memref<32x1xf32, #tpu.memory_space<vmem>>, %arg4: memref<32x1xf32, #tpu.memory_space<vmem>>, %arg5: memref<2x32xbf16, #tpu.memory_space<vmem>>, %arg6: memref<32x2xbf16, #tpu.memory_space<vmem>>, %arg7: memref<9x2x128xf32, #tpu.memory_space<vmem>>, %arg8: memref<16x32xbf16, #tpu.memory_space<vmem>>, %arg9: memref<16x1xf32, #tpu.memory_space<vmem>>, %arg10: memref<16x128xf32, #tpu.memory_space<vmem>>) attributes {dimension_semantics = [], scalar_prefetch = 0 : i64, scratch_operands = 0 : i64, tpu.core_type = #tpu.core_type<tc>} {
    %c0 = arith.constant 0 : index
    %c0_0 = arith.constant 0 : index
    %0 = vector.load %arg1[%c0, %c0_0] : memref<32x36xbf16, #tpu.memory_space<vmem>>, vector<32x36xbf16>
    %c0_1 = arith.constant 0 : index
    %c0_2 = arith.constant 0 : index
    %1 = vector.load %arg0[%c0_1, %c0_2] : memref<36x512xbf16, #tpu.memory_space<vmem>>, vector<36x512xbf16>
    %cst = arith.constant dense<0.000000e+00> : vector<32x512xf32>
    %2 = tpu.matmul %0, %1, %cst {dimension_numbers = #tpu.dot_dimension_numbers<[1], [0], [0], [1], [0, 0, 1, 1], [], []>} : vector<32x36xbf16>, vector<36x512xbf16>, vector<32x512xf32> -> vector<32x512xf32>
    %c0_3 = arith.constant 0 : index
    %c0_4 = arith.constant 0 : index
    %3 = vector.load %arg2[%c0_3, %c0_4] : memref<32x1xf32, #tpu.memory_space<vmem>>, vector<32x1xf32>
    %4 = vector.broadcast %3 : vector<32x1xf32> to vector<32x512xf32>
    %5 = arith.addf %2, %4 : vector<32x512xf32>
    %cst_5 = arith.constant dense<0.000000e+00> : vector<32xf32>
    %6 = vector.multi_reduction <add>, %5, %cst_5 [1] : vector<32x512xf32> to vector<32xf32>
    %7 = vector.shape_cast %6 : vector<32xf32> to vector<32x1xf32>
    %cst_6 = arith.constant 0.001953125 : f32
    %8 = vector.broadcast %cst_6 : f32 to vector<32x1xf32>
    %9 = arith.mulf %7, %8 : vector<32x1xf32>
    %10 = vector.broadcast %9 : vector<32x1xf32> to vector<32x512xf32>
    %11 = arith.subf %5, %10 : vector<32x512xf32>
    %12 = arith.mulf %11, %11 : vector<32x512xf32>
    %cst_7 = arith.constant dense<0.000000e+00> : vector<32xf32>
    %13 = vector.multi_reduction <add>, %12, %cst_7 [1] : vector<32x512xf32> to vector<32xf32>
    %14 = vector.shape_cast %13 : vector<32xf32> to vector<32x1xf32>
    %cst_8 = arith.constant 0.001953125 : f32
    %15 = vector.broadcast %cst_8 : f32 to vector<32x1xf32>
    %16 = arith.mulf %14, %15 : vector<32x1xf32>
    %cst_9 = arith.constant 9.99999974E-6 : f32
    %17 = vector.broadcast %cst_9 : f32 to vector<32x1xf32>
    %18 = arith.addf %16, %17 : vector<32x1xf32>
    %19 = math.rsqrt %18 : vector<32x1xf32>
    %20 = vector.broadcast %19 : vector<32x1xf32> to vector<32x512xf32>
    %21 = arith.mulf %11, %20 : vector<32x512xf32>
    %c0_10 = arith.constant 0 : index
    %c0_11 = arith.constant 0 : index
    %22 = vector.load %arg3[%c0_10, %c0_11] : memref<32x1xf32, #tpu.memory_space<vmem>>, vector<32x1xf32>
    %23 = vector.broadcast %22 : vector<32x1xf32> to vector<32x512xf32>
    %24 = arith.mulf %21, %23 : vector<32x512xf32>
    %c0_12 = arith.constant 0 : index
    %c0_13 = arith.constant 0 : index
    %25 = vector.load %arg4[%c0_12, %c0_13] : memref<32x1xf32, #tpu.memory_space<vmem>>, vector<32x1xf32>
    %26 = vector.broadcast %25 : vector<32x1xf32> to vector<32x512xf32>
    %27 = arith.addf %24, %26 : vector<32x512xf32>
    %cst_14 = arith.constant 0.000000e+00 : f32
    %28 = vector.broadcast %cst_14 : f32 to vector<32x512xf32>
    %29 = arith.maximumf %27, %28 : vector<32x512xf32>
    %30 = vector.extract_strided_slice %29 {offsets = [0, 0], sizes = [32, 128], strides = [1, 1]} : vector<32x512xf32> to vector<32x128xf32>
    %31 = vector.extract_strided_slice %29 {offsets = [0, 128], sizes = [32, 128], strides = [1, 1]} : vector<32x512xf32> to vector<32x128xf32>
    %32 = arith.maximumf %30, %31 : vector<32x128xf32>
    %33 = vector.extract_strided_slice %29 {offsets = [0, 256], sizes = [32, 128], strides = [1, 1]} : vector<32x512xf32> to vector<32x128xf32>
    %34 = vector.extract_strided_slice %29 {offsets = [0, 384], sizes = [32, 128], strides = [1, 1]} : vector<32x512xf32> to vector<32x128xf32>
    %35 = arith.maximumf %33, %34 : vector<32x128xf32>
    %36 = arith.maximumf %32, %35 : vector<32x128xf32>
    %37 = vector.extract_strided_slice %36 {offsets = [0, 0], sizes = [32, 64], strides = [1, 1]} : vector<32x128xf32> to vector<32x64xf32>
    %cst_15 = arith.constant dense<0.000000e+00> : vector<32xf32>
    %38 = vector.multi_reduction <add>, %37, %cst_15 [1] : vector<32x64xf32> to vector<32xf32>
    %39 = vector.shape_cast %38 : vector<32xf32> to vector<32x1xf32>
    %cst_16 = arith.constant 1.562500e-02 : f32
    %40 = vector.broadcast %cst_16 : f32 to vector<32x1xf32>
    %41 = arith.mulf %39, %40 : vector<32x1xf32>
    %cst_17 = arith.constant dense<0xFF800000> : vector<32xf32>
    %42 = vector.multi_reduction <maximumf>, %37, %cst_17 [1] : vector<32x64xf32> to vector<32xf32>
    %43 = vector.shape_cast %42 : vector<32xf32> to vector<32x1xf32>
    %44 = vector.extract_strided_slice %36 {offsets = [0, 64], sizes = [32, 64], strides = [1, 1]} : vector<32x128xf32> to vector<32x64xf32>
    %cst_18 = arith.constant dense<0.000000e+00> : vector<32xf32>
    %45 = vector.multi_reduction <add>, %44, %cst_18 [1] : vector<32x64xf32> to vector<32xf32>
    %46 = vector.shape_cast %45 : vector<32xf32> to vector<32x1xf32>
    %cst_19 = arith.constant 1.562500e-02 : f32
    %47 = vector.broadcast %cst_19 : f32 to vector<32x1xf32>
    %48 = arith.mulf %46, %47 : vector<32x1xf32>
    %cst_20 = arith.constant dense<0xFF800000> : vector<32xf32>
    %49 = vector.multi_reduction <maximumf>, %44, %cst_20 [1] : vector<32x64xf32> to vector<32xf32>
    %50 = vector.shape_cast %49 : vector<32xf32> to vector<32x1xf32>
    %51 = tpu.concatenate %41, %48 in 1 : vector<32x1xf32>, vector<32x1xf32> -> vector<32x2xf32>
    %52 = tpu.concatenate %43, %50 in 1 : vector<32x1xf32>, vector<32x1xf32> -> vector<32x2xf32>
    %c0_21 = arith.constant 0 : index
    %c0_22 = arith.constant 0 : index
    %53 = vector.load %arg5[%c0_21, %c0_22] : memref<2x32xbf16, #tpu.memory_space<vmem>>, vector<2x32xbf16>
    %54 = arith.truncf %51 : vector<32x2xf32> to vector<32x2xbf16>
    %cst_23 = arith.constant dense<0.000000e+00> : vector<2x2xf32>
    %55 = tpu.matmul %53, %54, %cst_23 {dimension_numbers = #tpu.dot_dimension_numbers<[1], [0], [0], [1], [0, 0, 1, 1], [], []>} : vector<2x32xbf16>, vector<32x2xbf16>, vector<2x2xf32> -> vector<2x2xf32>
    %cst_24 = arith.constant 0.000000e+00 : f32
    %56 = vector.broadcast %cst_24 : f32 to vector<2x2xf32>
    %57 = arith.maximumf %55, %56 : vector<2x2xf32>
    %c0_25 = arith.constant 0 : index
    %c0_26 = arith.constant 0 : index
    %58 = vector.load %arg6[%c0_25, %c0_26] : memref<32x2xbf16, #tpu.memory_space<vmem>>, vector<32x2xbf16>
    %59 = arith.truncf %57 : vector<2x2xf32> to vector<2x2xbf16>
    %cst_27 = arith.constant dense<0.000000e+00> : vector<32x2xf32>
    %60 = tpu.matmul %58, %59, %cst_27 {dimension_numbers = #tpu.dot_dimension_numbers<[1], [0], [0], [1], [0, 0, 1, 1], [], []>} : vector<32x2xbf16>, vector<2x2xbf16>, vector<32x2xf32> -> vector<32x2xf32>
    %c0_28 = arith.constant 0 : index
    %c0_29 = arith.constant 0 : index
    %61 = vector.load %arg5[%c0_28, %c0_29] : memref<2x32xbf16, #tpu.memory_space<vmem>>, vector<2x32xbf16>
    %62 = arith.truncf %52 : vector<32x2xf32> to vector<32x2xbf16>
    %cst_30 = arith.constant dense<0.000000e+00> : vector<2x2xf32>
    %63 = tpu.matmul %61, %62, %cst_30 {dimension_numbers = #tpu.dot_dimension_numbers<[1], [0], [0], [1], [0, 0, 1, 1], [], []>} : vector<2x32xbf16>, vector<32x2xbf16>, vector<2x2xf32> -> vector<2x2xf32>
    %cst_31 = arith.constant 0.000000e+00 : f32
    %64 = vector.broadcast %cst_31 : f32 to vector<2x2xf32>
    %65 = arith.maximumf %63, %64 : vector<2x2xf32>
    %c0_32 = arith.constant 0 : index
    %c0_33 = arith.constant 0 : index
    %66 = vector.load %arg6[%c0_32, %c0_33] : memref<32x2xbf16, #tpu.memory_space<vmem>>, vector<32x2xbf16>
    %67 = arith.truncf %65 : vector<2x2xf32> to vector<2x2xbf16>
    %cst_34 = arith.constant dense<0.000000e+00> : vector<32x2xf32>
    %68 = tpu.matmul %66, %67, %cst_34 {dimension_numbers = #tpu.dot_dimension_numbers<[1], [0], [0], [1], [0, 0, 1, 1], [], []>} : vector<32x2xbf16>, vector<2x2xbf16>, vector<32x2xf32> -> vector<32x2xf32>
    %69 = arith.addf %60, %68 : vector<32x2xf32>
    %cst_35 = arith.constant 0.000000e+00 : f32
    %70 = vector.broadcast %cst_35 : f32 to vector<32x2xf32>
    %71 = arith.subf %70, %69 : vector<32x2xf32>
    %72 = math.exp %71 : vector<32x2xf32>
    %cst_36 = arith.constant 1.000000e+00 : f32
    %73 = vector.broadcast %cst_36 : f32 to vector<32x2xf32>
    %74 = arith.addf %73, %72 : vector<32x2xf32>
    %cst_37 = arith.constant 1.000000e+00 : f32
    %75 = vector.broadcast %cst_37 : f32 to vector<32x2xf32>
    %76 = arith.divf %75, %74 : vector<32x2xf32>
    %77 = vector.extract_strided_slice %36 {offsets = [0, 0], sizes = [32, 64], strides = [1, 1]} : vector<32x128xf32> to vector<32x64xf32>
    %78 = vector.extract_strided_slice %76 {offsets = [0, 0], sizes = [32, 1], strides = [1, 1]} : vector<32x2xf32> to vector<32x1xf32>
    %79 = vector.broadcast %78 : vector<32x1xf32> to vector<32x64xf32>
    %80 = arith.mulf %77, %79 : vector<32x64xf32>
    %81 = vector.extract_strided_slice %36 {offsets = [0, 64], sizes = [32, 64], strides = [1, 1]} : vector<32x128xf32> to vector<32x64xf32>
    %82 = vector.extract_strided_slice %76 {offsets = [0, 1], sizes = [32, 1], strides = [1, 1]} : vector<32x2xf32> to vector<32x1xf32>
    %83 = vector.broadcast %82 : vector<32x1xf32> to vector<32x64xf32>
    %84 = arith.mulf %81, %83 : vector<32x64xf32>
    %85 = tpu.concatenate %80, %84 in 1 : vector<32x64xf32>, vector<32x64xf32> -> vector<32x128xf32>
    %cst_38 = arith.constant dense<0.000000e+00> : vector<128xf32>
    %86 = vector.multi_reduction <add>, %85, %cst_38 [0] : vector<32x128xf32> to vector<128xf32>
    %87 = vector.shape_cast %86 : vector<128xf32> to vector<1x128xf32>
    %cst_39 = arith.constant 3.125000e-02 : f32
    %88 = vector.broadcast %cst_39 : f32 to vector<1x128xf32>
    %89 = arith.mulf %87, %88 : vector<1x128xf32>
    %cst_40 = arith.constant dense<0xFF800000> : vector<128xf32>
    %90 = vector.multi_reduction <maximumf>, %85, %cst_40 [0] : vector<32x128xf32> to vector<128xf32>
    %91 = vector.shape_cast %90 : vector<128xf32> to vector<1x128xf32>
    %92 = tpu.concatenate %89, %91 in 0 : vector<1x128xf32>, vector<1x128xf32> -> vector<2x128xf32>
    %cst_41 = arith.constant 0.000000e+00 : f32
    %93 = vector.broadcast %cst_41 : f32 to vector<2x128xf32>
    %c9_i32 = arith.constant 9 : i32
    %94 = tpu.dynamic_rotate %92 by %c9_i32 dim 1 : vector<2x128xf32>, i32 -> vector<2x128xf32>
    %c0_42 = arith.constant 0 : index
    %c0_43 = arith.constant 0 : index
    %c0_44 = arith.constant 0 : index
    %95 = vector.load %arg7[%c0_42, %c0_43, %c0_44] : memref<9x2x128xf32, #tpu.memory_space<vmem>>, vector<1x2x128xf32>
    %96 = vector.shape_cast %95 : vector<1x2x128xf32> to vector<2x128xf32>
    %97 = arith.mulf %96, %94 : vector<2x128xf32>
    %98 = arith.addf %93, %97 : vector<2x128xf32>
    %c8_i32 = arith.constant 8 : i32
    %99 = tpu.dynamic_rotate %92 by %c8_i32 dim 1 : vector<2x128xf32>, i32 -> vector<2x128xf32>
    %c1 = arith.constant 1 : index
    %c0_45 = arith.constant 0 : index
    %c0_46 = arith.constant 0 : index
    %100 = vector.load %arg7[%c1, %c0_45, %c0_46] : memref<9x2x128xf32, #tpu.memory_space<vmem>>, vector<1x2x128xf32>
    %101 = vector.shape_cast %100 : vector<1x2x128xf32> to vector<2x128xf32>
    %102 = arith.mulf %101, %99 : vector<2x128xf32>
    %103 = arith.addf %98, %102 : vector<2x128xf32>
    %c7_i32 = arith.constant 7 : i32
    %104 = tpu.dynamic_rotate %92 by %c7_i32 dim 1 : vector<2x128xf32>, i32 -> vector<2x128xf32>
    %c2 = arith.constant 2 : index
    %c0_47 = arith.constant 0 : index
    %c0_48 = arith.constant 0 : index
    %105 = vector.load %arg7[%c2, %c0_47, %c0_48] : memref<9x2x128xf32, #tpu.memory_space<vmem>>, vector<1x2x128xf32>
    %106 = vector.shape_cast %105 : vector<1x2x128xf32> to vector<2x128xf32>
    %107 = arith.mulf %106, %104 : vector<2x128xf32>
    %108 = arith.addf %103, %107 : vector<2x128xf32>
    %c1_i32 = arith.constant 1 : i32
    %109 = tpu.dynamic_rotate %92 by %c1_i32 dim 1 : vector<2x128xf32>, i32 -> vector<2x128xf32>
    %c3 = arith.constant 3 : index
    %c0_49 = arith.constant 0 : index
    %c0_50 = arith.constant 0 : index
    %110 = vector.load %arg7[%c3, %c0_49, %c0_50] : memref<9x2x128xf32, #tpu.memory_space<vmem>>, vector<1x2x128xf32>
    %111 = vector.shape_cast %110 : vector<1x2x128xf32> to vector<2x128xf32>
    %112 = arith.mulf %111, %109 : vector<2x128xf32>
    %113 = arith.addf %108, %112 : vector<2x128xf32>
    %c4 = arith.constant 4 : index
    %c0_51 = arith.constant 0 : index
    %c0_52 = arith.constant 0 : index
    %114 = vector.load %arg7[%c4, %c0_51, %c0_52] : memref<9x2x128xf32, #tpu.memory_space<vmem>>, vector<1x2x128xf32>
    %115 = vector.shape_cast %114 : vector<1x2x128xf32> to vector<2x128xf32>
    %116 = arith.mulf %115, %92 : vector<2x128xf32>
    %117 = arith.addf %113, %116 : vector<2x128xf32>
    %c127_i32 = arith.constant 127 : i32
    %118 = tpu.dynamic_rotate %92 by %c127_i32 dim 1 : vector<2x128xf32>, i32 -> vector<2x128xf32>
    %c5 = arith.constant 5 : index
    %c0_53 = arith.constant 0 : index
    %c0_54 = arith.constant 0 : index
    %119 = vector.load %arg7[%c5, %c0_53, %c0_54] : memref<9x2x128xf32, #tpu.memory_space<vmem>>, vector<1x2x128xf32>
    %120 = vector.shape_cast %119 : vector<1x2x128xf32> to vector<2x128xf32>
    %121 = arith.mulf %120, %118 : vector<2x128xf32>
    %122 = arith.addf %117, %121 : vector<2x128xf32>
    %c121_i32 = arith.constant 121 : i32
    %123 = tpu.dynamic_rotate %92 by %c121_i32 dim 1 : vector<2x128xf32>, i32 -> vector<2x128xf32>
    %c6 = arith.constant 6 : index
    %c0_55 = arith.constant 0 : index
    %c0_56 = arith.constant 0 : index
    %124 = vector.load %arg7[%c6, %c0_55, %c0_56] : memref<9x2x128xf32, #tpu.memory_space<vmem>>, vector<1x2x128xf32>
    %125 = vector.shape_cast %124 : vector<1x2x128xf32> to vector<2x128xf32>
    %126 = arith.mulf %125, %123 : vector<2x128xf32>
    %127 = arith.addf %122, %126 : vector<2x128xf32>
    %c120_i32 = arith.constant 120 : i32
    %128 = tpu.dynamic_rotate %92 by %c120_i32 dim 1 : vector<2x128xf32>, i32 -> vector<2x128xf32>
    %c7 = arith.constant 7 : index
    %c0_57 = arith.constant 0 : index
    %c0_58 = arith.constant 0 : index
    %129 = vector.load %arg7[%c7, %c0_57, %c0_58] : memref<9x2x128xf32, #tpu.memory_space<vmem>>, vector<1x2x128xf32>
    %130 = vector.shape_cast %129 : vector<1x2x128xf32> to vector<2x128xf32>
    %131 = arith.mulf %130, %128 : vector<2x128xf32>
    %132 = arith.addf %127, %131 : vector<2x128xf32>
    %c119_i32 = arith.constant 119 : i32
    %133 = tpu.dynamic_rotate %92 by %c119_i32 dim 1 : vector<2x128xf32>, i32 -> vector<2x128xf32>
    %c8 = arith.constant 8 : index
    %c0_59 = arith.constant 0 : index
    %c0_60 = arith.constant 0 : index
    %134 = vector.load %arg7[%c8, %c0_59, %c0_60] : memref<9x2x128xf32, #tpu.memory_space<vmem>>, vector<1x2x128xf32>
    %135 = vector.shape_cast %134 : vector<1x2x128xf32> to vector<2x128xf32>
    %136 = arith.mulf %135, %133 : vector<2x128xf32>
    %137 = arith.addf %132, %136 : vector<2x128xf32>
    %138 = vector.extract_strided_slice %137 {offsets = [0, 0], sizes = [1, 128], strides = [1, 1]} : vector<2x128xf32> to vector<1x128xf32>
    %139 = vector.extract_strided_slice %137 {offsets = [1, 0], sizes = [1, 128], strides = [1, 1]} : vector<2x128xf32> to vector<1x128xf32>
    %140 = arith.addf %138, %139 : vector<1x128xf32>
    %cst_61 = arith.constant 0.000000e+00 : f32
    %141 = vector.broadcast %cst_61 : f32 to vector<1x128xf32>
    %142 = arith.subf %141, %140 : vector<1x128xf32>
    %143 = math.exp %142 : vector<1x128xf32>
    %cst_62 = arith.constant 1.000000e+00 : f32
    %144 = vector.broadcast %cst_62 : f32 to vector<1x128xf32>
    %145 = arith.addf %144, %143 : vector<1x128xf32>
    %cst_63 = arith.constant 1.000000e+00 : f32
    %146 = vector.broadcast %cst_63 : f32 to vector<1x128xf32>
    %147 = arith.divf %146, %145 : vector<1x128xf32>
    %148 = vector.broadcast %147 : vector<1x128xf32> to vector<32x128xf32>
    %149 = arith.mulf %85, %148 : vector<32x128xf32>
    %c0_64 = arith.constant 0 : index
    %c0_65 = arith.constant 0 : index
    %150 = vector.load %arg8[%c0_64, %c0_65] : memref<16x32xbf16, #tpu.memory_space<vmem>>, vector<16x32xbf16>
    %151 = arith.truncf %149 : vector<32x128xf32> to vector<32x128xbf16>
    %cst_66 = arith.constant dense<0.000000e+00> : vector<16x128xf32>
    %152 = tpu.matmul %150, %151, %cst_66 {dimension_numbers = #tpu.dot_dimension_numbers<[1], [0], [0], [1], [0, 0, 1, 1], [], []>} : vector<16x32xbf16>, vector<32x128xbf16>, vector<16x128xf32> -> vector<16x128xf32>
    %c0_67 = arith.constant 0 : index
    %c0_68 = arith.constant 0 : index
    %153 = vector.load %arg9[%c0_67, %c0_68] : memref<16x1xf32, #tpu.memory_space<vmem>>, vector<16x1xf32>
    %154 = vector.broadcast %153 : vector<16x1xf32> to vector<16x128xf32>
    %155 = arith.addf %152, %154 : vector<16x128xf32>
    %cst_69 = arith.constant 0.000000e+00 : f32
    %156 = vector.broadcast %cst_69 : f32 to vector<16x128xf32>
    %157 = arith.maximumf %155, %156 : vector<16x128xf32>
    %c0_70 = arith.constant 0 : index
    %c0_71 = arith.constant 0 : index
    %158 = vector.load %arg10[%c0_70, %c0_71] : memref<16x128xf32, #tpu.memory_space<vmem>>, vector<16x128xf32>
    tpu.vector_store %arg10[%c0_70, %c0_71], %157 {strides = array<i32>} : memref<16x128xf32, #tpu.memory_space<vmem>>, vector<16x128xf32>,
    return
  }
}

</mosaic_0001>

<llo_original>
// kernel: stm_renet_blockd_forward.1
$region0: #{stm_renet_blockd_forward.1}
  #allocation0 [shape = 'u32[]', space=smem, size = 0x4, offset = 0x4, fixed_abs, tag = 'smem constant byte address 0x4 - core index']
  #allocation1 [shape = 'u32[72,128]{1,0:T(1,128)}', space=vmem, size = 0x9000, scoped, tag = 'internal scratch']
  %s0 = inlined_call_operand.vmem [shape: bf16[36,512], index: 0, kind: input, shape index: {}]
  %s1 = inlined_call_operand.vmem [shape: bf16[32,36], index: 1, kind: input, shape index: {}]
  %s2 = inlined_call_operand.vmem [shape: f32[32,1], index: 2, kind: input, shape index: {}]
  %s3 = inlined_call_operand.vmem [shape: f32[32,1], index: 3, kind: input, shape index: {}]
  %s4 = inlined_call_operand.vmem [shape: f32[32,1], index: 4, kind: input, shape index: {}]
  %s5 = inlined_call_operand.vmem [shape: bf16[2,32], index: 5, kind: input, shape index: {}]
  %s6 = inlined_call_operand.vmem [shape: bf16[32,2], index: 6, kind: input, shape index: {}]
  %s7 = inlined_call_operand.vmem [shape: f32[9,2,128], index: 7, kind: input, shape index: {}]
  %s8 = inlined_call_operand.vmem [shape: bf16[16,32], index: 8, kind: input, shape index: {}]
  %s9 = inlined_call_operand.vmem [shape: f32[16,1], index: 9, kind: input, shape index: {}]
  %s10 = inlined_call_operand.vmem [shape: f32[16,128], index: 10, kind: output, shape index: {}]
  %s11 = sld [smem:[#allocation0]]
  $region50: #{stm_renet_blockd_forward.1} parent=0
    _
  %s13 = ssub.s32 1, %s11
  %s14 = scalar_select 0, %s13, %s11
  // Predicated region
  $region2: #{stm_renet_blockd_forward.1} parent=0 // pred_check
    _
  $region3: #{stm_renet_blockd_forward.1} parent=0 // pred_check_branch
    %16 = sbr.rel (0) target = $region5
  $region4: #{stm_renet_blockd_forward.1} parent=0 // pred_region
    _
  $region5: #{stm_renet_blockd_forward.1} parent=0 // pred_fallthru
    _
  // Predicated region
  $region6: #{stm_renet_blockd_forward.1} parent=0 // pred_check
    _
  $region7: #{stm_renet_blockd_forward.1} parent=0 // pred_check_branch
    %18 = sbr.rel (0) target = $region9
  $region8: #{stm_renet_blockd_forward.1} parent=0 // pred_region
    _
  $region9: #{stm_renet_blockd_forward.1} parent=0 // pred_fallthru
    _
  // Predicated region
  $region10: #{stm_renet_blockd_forward.1} parent=0 // pred_check
    _
  $region11: #{stm_renet_blockd_forward.1} parent=0 // pred_check_branch
    %20 = sbr.rel (0) target = $region13
  $region12: #{stm_renet_blockd_forward.1} parent=0 // pred_region
    _
  $region13: #{stm_renet_blockd_forward.1} parent=0 // pred_fallthru
    _
  // Predicated region
  $region14: #{stm_renet_blockd_forward.1} parent=0 // pred_check
    _
  $region15: #{stm_renet_blockd_forward.1} parent=0 // pred_check_branch
    %22 = sbr.rel (0) target = $region17
  $region16: #{stm_renet_blockd_forward.1} parent=0 // pred_region
    _
  $region17: #{stm_renet_blockd_forward.1} parent=0 // pred_fallthru
    _
  // Predicated region
  $region18: #{stm_renet_blockd_forward.1} parent=0 // pred_check
    _
  $region19: #{stm_renet_blockd_forward.1} parent=0 // pred_check_branch
    %24 = sbr.rel (0) target = $region21
  $region20: #{stm_renet_blockd_forward.1} parent=0 // pred_region
    _
  $region21: #{stm_renet_blockd_forward.1} parent=0 // pred_fallthru
    _
  // Predicated region
  $region22: #{stm_renet_blockd_forward.1} parent=0 // pred_check
    _
  $region23: #{stm_renet_blockd_forward.1} parent=0 // pred_check_branch
    %26 = sbr.rel (0) target = $region25
  $region24: #{stm_renet_blockd_forward.1} parent=0 // pred_region
    _
  $region25: #{stm_renet_blockd_forward.1} parent=0 // pred_fallthru
    _
  // Predicated region
  $region26: #{stm_renet_blockd_forward.1} parent=0 // pred_check
    _
  $region27: #{stm_renet_blockd_forward.1} parent=0 // pred_check_branch
    %28 = sbr.rel (0) target = $region29
  $region28: #{stm_renet_blockd_forward.1} parent=0 // pred_region
    _
  $region29: #{stm_renet_blockd_forward.1} parent=0 // pred_fallthru
    _
  // Predicated region
  $region30: #{stm_renet_blockd_forward.1} parent=0 // pred_check
    _
  $region31: #{stm_renet_blockd_forward.1} parent=0 // pred_check_branch
    %30 = sbr.rel (0) target = $region33
  $region32: #{stm_renet_blockd_forward.1} parent=0 // pred_region
    _
  $region33: #{stm_renet_blockd_forward.1} parent=0 // pred_fallthru
    _
  // Predicated region
  $region34: #{stm_renet_blockd_forward.1} parent=0 // pred_check
    _
  $region35: #{stm_renet_blockd_forward.1} parent=0 // pred_check_branch
    %32 = sbr.rel (0) target = $region37
  $region36: #{stm_renet_blockd_forward.1} parent=0 // pred_region
    _
  $region37: #{stm_renet_blockd_forward.1} parent=0 // pred_fallthru
    _
  // Predicated region
  $region38: #{stm_renet_blockd_forward.1} parent=0 // pred_check
    _
  $region39: #{stm_renet_blockd_forward.1} parent=0 // pred_check_branch
    %34 = sbr.rel (0) target = $region41
  $region40: #{stm_renet_blockd_forward.1} parent=0 // pred_region
    _
  $region41: #{stm_renet_blockd_forward.1} parent=0 // pred_fallthru
    _
  %v36 = vld [vmem:[%s1] sm:$0xf]
  %v37 = vld [vmem:[%s1 + $0x4] sm:$0xf]
  %v38 = vld [vmem:[%s1 + $0x8] sm:$0xf]
  %v39 = vld [vmem:[%s1 + $0xc] sm:$0xf]
  %v40 = vld [vmem:[%s0] sm:$0xff]
  %v41 = vld [vmem:[%s0 + $0x8] sm:$0xff]
  %v42 = vld [vmem:[%s0 + $0x10] sm:$0xff]
  %v43 = vld [vmem:[%s0 + $0x18] sm:$0xff]
  %v44 = vld [vmem:[%s0 + $0x20] sm:$0xff]
  %v45 = vld [vmem:[%s0 + $0x28] sm:$0xff]
  %v46 = vld [vmem:[%s0 + $0x30] sm:$0xff]
  %v47 = vld [vmem:[%s0 + $0x38] sm:$0xff]
  %v48 = vld [vmem:[%s0 + $0x40] sm:$0x33]
  %v49 = vld [vmem:[%s0 + $0x48] sm:$0x33]
  %v50 = vld [vmem:[%s2] sm:$0xff]
  %v51 = vld [vmem:[%s2 + $0x8] sm:$0xff]
  %v52 = vld [vmem:[%s2 + $0x10] sm:$0xff]
  %v53 = vld [vmem:[%s2 + $0x18] sm:$0xff]
  %55 = vset.pattern.permute.xlu0 0
  %56 = vperm.xlu0 %55, %v50
  %v57 = vpop.permute.xlu0 %56
  %60 = vset.pattern.permute.xlu0 0
  %61 = vperm.xlu0 %60, %v51
  %v62 = vpop.permute.xlu0 %61
  %65 = vset.pattern.permute.xlu0 0
  %66 = vperm.xlu0 %65, %v52
  %v67 = vpop.permute.xlu0 %66
  %70 = vset.pattern.permute.xlu0 0
  %71 = vperm.xlu0 %70, %v53
  %v72 = vpop.permute.xlu0 %71
  %v78 = vunpack.c.l.b16 %v36
  %v79 = vunpack.c.l.b16 %v37
  %v80 = vunpack.c.l.b16 %v38
  %v81 = vunpack.c.l.b16 %v39
  %v82 = vpack.c.b16 %v79, %v78
  %v83 = vpack.c.b16 %v81, %v80
  %v94 = vunpack.c.l.b16 %v40
  %v95 = vunpack.c.h.b16 %v40
  %v96 = vunpack.c.l.b16 %v41
  %v97 = vunpack.c.h.b16 %v41
  %v98 = vunpack.c.l.b16 %v42
  %v99 = vunpack.c.h.b16 %v42
  %v100 = vunpack.c.l.b16 %v43
  %v101 = vunpack.c.h.b16 %v43
  %v102 = vunpack.c.l.b16 %v44
  %v103 = vunpack.c.h.b16 %v44
  %v104 = vunpack.c.l.b16 %v45
  %v105 = vunpack.c.h.b16 %v45
  %v106 = vunpack.c.l.b16 %v46
  %v107 = vunpack.c.h.b16 %v46
  %v108 = vunpack.c.l.b16 %v47
  %v109 = vunpack.c.h.b16 %v47
  %v110 = vunpack.c.l.b16 %v48
  %v111 = vunpack.c.h.b16 %v48
  %v112 = vunpack.c.l.b16 %v49
  %v113 = vunpack.c.h.b16 %v49
  %v114 = vpack.c.b16 %v98, %v94
  %v115 = vpack.c.b16 %v99, %v95
  %v116 = vpack.c.b16 %v100, %v96
  %v117 = vpack.c.b16 %v101, %v97
  %v118 = vpack.c.b16 %v106, %v102
  %v119 = vpack.c.b16 %v107, %v103
  %v120 = vpack.c.b16 %v108, %v104
  %v121 = vpack.c.b16 %v109, %v105
  %v122 = vpack.c.b16 %v110, %v110
  %v123 = vpack.c.b16 %v111, %v111
  %v124 = vpack.c.b16 %v112, %v112
  %v125 = vpack.c.b16 %v113, %v113
  %vm134 = vcmask 293888
  %v136 = vsel %vm134, %v82, 0
  %v139 = vsel %vm134, %v83, 0
  %vm141 = vcmask 1041408
  %v143 = vsel %vm141, %v122, 0
  %v146 = vsel %vm141, %v123, 0
  %v149 = vsel %vm141, %v124, 0
  %v152 = vsel %vm141, %v125, 0
  %154 = vmatpush.bf16.msra.mxu0 0
  %155 = vmatpush.bf16.msra.mxu0 0
  %156 = vmatpush.bf16.msra.mxu0 0
  %157 = vmatpush.bf16.msra.mxu0 0
  %158 = vmatpush.bf16.msra.mxu0 0
  %159 = vmatpush.bf16.msra.mxu0 %v143
  %160 = vmatpush.bf16.msra.mxu0 %v118
  %161 = vmatpush.bf16.msra.mxu0 %v114
  %162 = vmatmul.bf16.gmra.mxu0 %v136
  %v163 = vpop.f32.mrf.mxu0
  %v164 = vadd.f32 %v57, %v163
  %v165 = vpop.f32.mrf.mxu0
  %v166 = vadd.f32 %v62, %v165
  %167 = vmatmul.bf16.gmra.mxu0 %v139
  %v168 = vpop.f32.mrf.mxu0
  %v169 = vadd.f32 %v67, %v168
  %v170 = vpop.f32.mrf.mxu0
  %v171 = vadd.f32 %v72, %v170
  %172 = vdwg.mxu0
  %173 = vmatpush.bf16.msra.mxu0 0
  %174 = vmatpush.bf16.msra.mxu0 0
  %175 = vmatpush.bf16.msra.mxu0 0
  %176 = vmatpush.bf16.msra.mxu0 0
  %177 = vmatpush.bf16.msra.mxu0 0
  %178 = vmatpush.bf16.msra.mxu0 %v146
  %179 = vmatpush.bf16.msra.mxu0 %v119
  %180 = vmatpush.bf16.msra.mxu0 %v115
  %181 = vmatmul.bf16.gmra.mxu0 %v136
  %v182 = vpop.f32.mrf.mxu0
  %v183 = vadd.f32 %v57, %v182
  %v184 = vpop.f32.mrf.mxu0
  %v185 = vadd.f32 %v62, %v184
  %186 = vmatmul.bf16.gmra.mxu0 %v139
  %v187 = vpop.f32.mrf.mxu0
  %v188 = vadd.f32 %v67, %v187
  %v189 = vpop.f32.mrf.mxu0
  %v190 = vadd.f32 %v72, %v189
  %191 = vdwg.mxu0
  %192 = vmatpush.bf16.msra.mxu0 0
  %193 = vmatpush.bf16.msra.mxu0 0
  %194 = vmatpush.bf16.msra.mxu0 0
  %195 = vmatpush.bf16.msra.mxu0 0
  %196 = vmatpush.bf16.msra.mxu0 0
  %197 = vmatpush.bf16.msra.mxu0 %v149
  %198 = vmatpush.bf16.msra.mxu0 %v120
  %199 = vmatpush.bf16.msra.mxu0 %v116
  %200 = vmatmul.bf16.gmra.mxu0 %v136
  %v201 = vpop.f32.mrf.mxu0
  %v202 = vadd.f32 %v57, %v201
  %v203 = vpop.f32.mrf.mxu0
  %v204 = vadd.f32 %v62, %v203
  %205 = vmatmul.bf16.gmra.mxu0 %v139
  %v206 = vpop.f32.mrf.mxu0
  %v207 = vadd.f32 %v67, %v206
  %v208 = vpop.f32.mrf.mxu0
  %v209 = vadd.f32 %v72, %v208
  %210 = vdwg.mxu0
  %211 = vmatpush.bf16.msra.mxu0 0
  %212 = vmatpush.bf16.msra.mxu0 0
  %213 = vmatpush.bf16.msra.mxu0 0
  %214 = vmatpush.bf16.msra.mxu0 0
  %215 = vmatpush.bf16.msra.mxu0 0
  %216 = vmatpush.bf16.msra.mxu0 %v152
  %217 = vmatpush.bf16.msra.mxu0 %v121
  %218 = vmatpush.bf16.msra.mxu0 %v117
  %219 = vmatmul.bf16.gmra.mxu0 %v136
  %v220 = vpop.f32.mrf.mxu0
  %v221 = vadd.f32 %v57, %v220
  %v222 = vpop.f32.mrf.mxu0
  %v223 = vadd.f32 %v62, %v222
  %224 = vmatmul.bf16.gmra.mxu0 %v139
  %v225 = vpop.f32.mrf.mxu0
  %v226 = vadd.f32 %v67, %v225
  %v227 = vpop.f32.mrf.mxu0
  %v228 = vadd.f32 %v72, %v227
  %229 = vdwg.mxu0
  %v230 = vadd.f32 %v164, %v183
  %v231 = vadd.f32 %v230, %v202
  %v232 = vadd.f32 %v231, %v221
  %233 = vadd.xlane.f32.xlu0 %v232
  %v234 = vpop.xlane.xlu0 %233
  %v235 = vadd.f32 %v166, %v185
  %v236 = vadd.f32 %v235, %v204
  %v237 = vadd.f32 %v236, %v223
  %238 = vadd.xlane.f32.xlu0 %v237
  %v239 = vpop.xlane.xlu0 %238
  %v240 = vadd.f32 %v169, %v188
  %v241 = vadd.f32 %v240, %v207
  %v242 = vadd.f32 %v241, %v226
  %243 = vadd.xlane.f32.xlu0 %v242
  %v244 = vpop.xlane.xlu0 %243
  %v245 = vadd.f32 %v171, %v190
  %v246 = vadd.f32 %v245, %v209
  %v247 = vadd.f32 %v246, %v228
  %248 = vadd.xlane.f32.xlu0 %v247
  %v249 = vpop.xlane.xlu0 %248
  %v250 = vmul.f32 %v234, 0.001953125
  %v251 = vmul.f32 %v239, 0.001953125
  %v252 = vmul.f32 %v244, 0.001953125
  %v253 = vmul.f32 %v249, 0.001953125
  %v254 = vsub.f32 %v164, %v250
  %v255 = vsub.f32 %v183, %v250
  %v256 = vsub.f32 %v202, %v250
  %v257 = vsub.f32 %v221, %v250
  %v258 = vsub.f32 %v166, %v251
  %v259 = vsub.f32 %v185, %v251
  %v260 = vsub.f32 %v204, %v251
  %v261 = vsub.f32 %v223, %v251
  %v262 = vsub.f32 %v169, %v252
  %v263 = vsub.f32 %v188, %v252
  %v264 = vsub.f32 %v207, %v252
  %v265 = vsub.f32 %v226, %v252
  %v266 = vsub.f32 %v171, %v253
  %v267 = vsub.f32 %v190, %v253
  %v268 = vsub.f32 %v209, %v253
  %v269 = vsub.f32 %v228, %v253
  %v270 = vmul.f32 %v254, %v254
  %v271 = vmul.f32 %v255, %v255
  %v272 = vmul.f32 %v256, %v256
  %v273 = vmul.f32 %v257, %v257
  %v274 = vmul.f32 %v258, %v258
  %v275 = vmul.f32 %v259, %v259
  %v276 = vmul.f32 %v260, %v260
  %v277 = vmul.f32 %v261, %v261
  %v278 = vmul.f32 %v262, %v262
  %v279 = vmul.f32 %v263, %v263
  %v280 = vmul.f32 %v264, %v264
  %v281 = vmul.f32 %v265, %v265
  %v282 = vmul.f32 %v266, %v266
  %v283 = vmul.f32 %v267, %v267
  %v284 = vmul.f32 %v268, %v268
  %v285 = vmul.f32 %v269, %v269
  %v286 = vadd.f32 %v270, %v271
  %v287 = vadd.f32 %v286, %v272
  %v288 = vadd.f32 %v287, %v273
  %289 = vadd.xlane.f32.xlu0 %v288
  %v290 = vpop.xlane.xlu0 %289
  %v291 = vadd.f32 %v274, %v275
  %v292 = vadd.f32 %v291, %v276
  %v293 = vadd.f32 %v292, %v277
  %294 = vadd.xlane.f32.xlu0 %v293
  %v295 = vpop.xlane.xlu0 %294
  %v296 = vadd.f32 %v278, %v279
  %v297 = vadd.f32 %v296, %v280
  %v298 = vadd.f32 %v297, %v281
  %299 = vadd.xlane.f32.xlu0 %v298
  %v300 = vpop.xlane.xlu0 %299
  %v301 = vadd.f32 %v282, %v283
  %v302 = vadd.f32 %v301, %v284
  %v303 = vadd.f32 %v302, %v285
  %304 = vadd.xlane.f32.xlu0 %v303
  %v305 = vpop.xlane.xlu0 %304
  %v306 = vmul.f32 %v290, 0.001953125
  %v307 = vmul.f32 %v295, 0.001953125
  %v308 = vmul.f32 %v300, 0.001953125
  %v309 = vmul.f32 %v305, 0.001953125
  %v310 = vadd.f32 %v306, 1e-05
  %v311 = vadd.f32 %v307, 1e-05
  %v312 = vadd.f32 %v308, 1e-05
  %v313 = vadd.f32 %v309, 1e-05
  %v314 = vrsqrt.pop %v310
  %v315 = vmul.f32 %v314, %v310
  %v316 = vmul.f32 %v315, %v314
  %v317 = vmul.f32 0.5, %v316
  %v318 = vsub.f32 1.5, %v317
  %v319 = vmul.f32 %v314, %v318
  %vm320 = vweird.f32 %v310
  %vm321 = vweird.f32 %v314
  %vm322 = vmor %vm320, %vm321
  %v323 = vsel %vm322, %v314, %v319
  %v324 = vrsqrt.pop %v311
  %v325 = vmul.f32 %v324, %v311
  %v326 = vmul.f32 %v325, %v324
  %v327 = vmul.f32 0.5, %v326
  %v328 = vsub.f32 1.5, %v327
  %v329 = vmul.f32 %v324, %v328
  %vm330 = vweird.f32 %v311
  %vm331 = vweird.f32 %v324
  %vm332 = vmor %vm330, %vm331
  %v333 = vsel %vm332, %v324, %v329
  %v334 = vrsqrt.pop %v312
  %v335 = vmul.f32 %v334, %v312
  %v336 = vmul.f32 %v335, %v334
  %v337 = vmul.f32 0.5, %v336
  %v338 = vsub.f32 1.5, %v337
  %v339 = vmul.f32 %v334, %v338
  %vm340 = vweird.f32 %v312
  %vm341 = vweird.f32 %v334
  %vm342 = vmor %vm340, %vm341
  %v343 = vsel %vm342, %v334, %v339
  %v344 = vrsqrt.pop %v313
  %v345 = vmul.f32 %v344, %v313
  %v346 = vmul.f32 %v345, %v344
  %v347 = vmul.f32 0.5, %v346
  %v348 = vsub.f32 1.5, %v347
  %v349 = vmul.f32 %v344, %v348
  %vm350 = vweird.f32 %v313
  %vm351 = vweird.f32 %v344
  %vm352 = vmor %vm350, %vm351
  %v353 = vsel %vm352, %v344, %v349
  %v354 = vmul.f32 %v254, %v323
  %v355 = vmul.f32 %v255, %v323
  %v356 = vmul.f32 %v256, %v323
  %v357 = vmul.f32 %v257, %v323
  %v358 = vmul.f32 %v258, %v333
  %v359 = vmul.f32 %v259, %v333
  %v360 = vmul.f32 %v260, %v333
  %v361 = vmul.f32 %v261, %v333
  %v362 = vmul.f32 %v262, %v343
  %v363 = vmul.f32 %v263, %v343
  %v364 = vmul.f32 %v264, %v343
  %v365 = vmul.f32 %v265, %v343
  %v366 = vmul.f32 %v266, %v353
  %v367 = vmul.f32 %v267, %v353
  %v368 = vmul.f32 %v268, %v353
  %v369 = vmul.f32 %v269, %v353
  %v370 = vld [vmem:[%s3] sm:$0xff]
  %v371 = vld [vmem:[%s3 + $0x8] sm:$0xff]
  %v372 = vld [vmem:[%s3 + $0x10] sm:$0xff]
  %v373 = vld [vmem:[%s3 + $0x18] sm:$0xff]
  %375 = vset.pattern.permute.xlu0 0
  %376 = vperm.xlu0 %375, %v370
  %v377 = vpop.permute.xlu0 %376
  %380 = vset.pattern.permute.xlu0 0
  %381 = vperm.xlu0 %380, %v371
  %v382 = vpop.permute.xlu0 %381
  %385 = vset.pattern.permute.xlu0 0
  %386 = vperm.xlu0 %385, %v372
  %v387 = vpop.permute.xlu0 %386
  %390 = vset.pattern.permute.xlu0 0
  %391 = vperm.xlu0 %390, %v373
  %v392 = vpop.permute.xlu0 %391
  %v394 = vmul.f32 %v354, %v377
  %v395 = vmul.f32 %v355, %v377
  %v396 = vmul.f32 %v356, %v377
  %v397 = vmul.f32 %v357, %v377
  %v398 = vmul.f32 %v358, %v382
  %v399 = vmul.f32 %v359, %v382
  %v400 = vmul.f32 %v360, %v382
  %v401 = vmul.f32 %v361, %v382
  %v402 = vmul.f32 %v362, %v387
  %v403 = vmul.f32 %v363, %v387
  %v404 = vmul.f32 %v364, %v387
  %v405 = vmul.f32 %v365, %v387
  %v406 = vmul.f32 %v366, %v392
  %v407 = vmul.f32 %v367, %v392
  %v408 = vmul.f32 %v368, %v392
  %v409 = vmul.f32 %v369, %v392
  %v410 = vld [vmem:[%s4] sm:$0xff]
  %v411 = vld [vmem:[%s4 + $0x8] sm:$0xff]
  %v412 = vld [vmem:[%s4 + $0x10] sm:$0xff]
  %v413 = vld [vmem:[%s4 + $0x18] sm:$0xff]
  %415 = vset.pattern.permute.xlu0 0
  %416 = vperm.xlu0 %415, %v410
  %v417 = vpop.permute.xlu0 %416
  %420 = vset.pattern.permute.xlu0 0
  %421 = vperm.xlu0 %420, %v411
  %v422 = vpop.permute.xlu0 %421
  %425 = vset.pattern.permute.xlu0 0
  %426 = vperm.xlu0 %425, %v412
  %v427 = vpop.permute.xlu0 %426
  %430 = vset.pattern.permute.xlu0 0
  %431 = vperm.xlu0 %430, %v413
  %v432 = vpop.permute.xlu0 %431
  %v434 = vadd.f32 %v394, %v417
  %v435 = vadd.f32 %v395, %v417
  %v436 = vadd.f32 %v396, %v417
  %v437 = vadd.f32 %v397, %v417
  %v438 = vadd.f32 %v398, %v422
  %v439 = vadd.f32 %v399, %v422
  %v440 = vadd.f32 %v400, %v422
  %v441 = vadd.f32 %v401, %v422
  %v442 = vadd.f32 %v402, %v427
  %v443 = vadd.f32 %v403, %v427
  %v444 = vadd.f32 %v404, %v427
  %v445 = vadd.f32 %v405, %v427
  %v446 = vadd.f32 %v406, %v432
  %v447 = vadd.f32 %v407, %v432
  %v448 = vadd.f32 %v408, %v432
  %v449 = vadd.f32 %v409, %v432
  %v450 = vmax.f32 %v434, 0.0
  %v451 = vmax.f32 %v435, 0.0
  %v452 = vmax.f32 %v436, 0.0
  %v453 = vmax.f32 %v437, 0.0
  %v454 = vmax.f32 %v438, 0.0
  %v455 = vmax.f32 %v439, 0.0
  %v456 = vmax.f32 %v440, 0.0
  %v457 = vmax.f32 %v441, 0.0
  %v458 = vmax.f32 %v442, 0.0
  %v459 = vmax.f32 %v443, 0.0
  %v460 = vmax.f32 %v444, 0.0
  %v461 = vmax.f32 %v445, 0.0
  %v462 = vmax.f32 %v446, 0.0
  %v463 = vmax.f32 %v447, 0.0
  %v464 = vmax.f32 %v448, 0.0
  %v465 = vmax.f32 %v449, 0.0
  %v466 = vmax.f32 %v450, %v451
  %v467 = vmax.f32 %v454, %v455
  %v468 = vmax.f32 %v458, %v459
  %v469 = vmax.f32 %v462, %v463
  %v470 = vmax.f32 %v452, %v453
  %v471 = vmax.f32 %v456, %v457
  %v472 = vmax.f32 %v460, %v461
  %v473 = vmax.f32 %v464, %v465
  %v474 = vmax.f32 %v466, %v470
  %v475 = vmax.f32 %v467, %v471
  %v476 = vmax.f32 %v468, %v472
  %v477 = vmax.f32 %v469, %v473
  %vm478 = vcmask 523264
  %v479 = vsel %vm478, %v474, 0.0
  %480 = vadd.xlane.f32.xlu0 %v479
  %v481 = vpop.xlane.xlu0 %480
  %v482 = vsel %vm478, %v475, 0.0
  %483 = vadd.xlane.f32.xlu0 %v482
  %v484 = vpop.xlane.xlu0 %483
  %v485 = vsel %vm478, %v476, 0.0
  %486 = vadd.xlane.f32.xlu0 %v485
  %v487 = vpop.xlane.xlu0 %486
  %v488 = vsel %vm478, %v477, 0.0
  %489 = vadd.xlane.f32.xlu0 %v488
  %v490 = vpop.xlane.xlu0 %489
  %v491 = vmul.f32 %v481, 0.015625
  %v492 = vmul.f32 %v484, 0.015625
  %v493 = vmul.f32 %v487, 0.015625
  %v494 = vmul.f32 %v490, 0.015625
  %v495 = vsel %vm478, %v474, -inf
  %496 = vmax.xlane.f32.xlu0 %v495
  %v497 = vpop.xlane.xlu0 %496
  %v498 = vsel %vm478, %v475, -inf
  %499 = vmax.xlane.f32.xlu0 %v498
  %v500 = vpop.xlane.xlu0 %499
  %v501 = vsel %vm478, %v476, -inf
  %502 = vmax.xlane.f32.xlu0 %v501
  %v503 = vpop.xlane.xlu0 %502
  %v504 = vsel %vm478, %v477, -inf
  %505 = vmax.xlane.f32.xlu0 %v504
  %v506 = vpop.xlane.xlu0 %505
  %511 = vrot.lane.b32.xlu0 %v474, 64
  %v512 = vpop.permute.xlu0 %511
  %513 = vrot.lane.b32.xlu0 %v475, 64
  %v514 = vpop.permute.xlu0 %513
  %515 = vrot.lane.b32.xlu0 %v476, 64
  %v516 = vpop.permute.xlu0 %515
  %517 = vrot.lane.b32.xlu0 %v477, 64
  %v518 = vpop.permute.xlu0 %517
  %v523 = vsel %vm478, %v512, 0.0
  %524 = vadd.xlane.f32.xlu0 %v523
  %v525 = vpop.xlane.xlu0 %524
  %v526 = vsel %vm478, %v514, 0.0
  %527 = vadd.xlane.f32.xlu0 %v526
  %v528 = vpop.xlane.xlu0 %527
  %v529 = vsel %vm478, %v516, 0.0
  %530 = vadd.xlane.f32.xlu0 %v529
  %v531 = vpop.xlane.xlu0 %530
  %v532 = vsel %vm478, %v518, 0.0
  %533 = vadd.xlane.f32.xlu0 %v532
  %v534 = vpop.xlane.xlu0 %533
  %v535 = vmul.f32 %v525, 0.015625
  %v536 = vmul.f32 %v528, 0.015625
  %v537 = vmul.f32 %v531, 0.015625
  %v538 = vmul.f32 %v534, 0.015625
  %vm539 = vcmask 1048064
  %v540 = vsel %vm539, %v474, -inf
  %541 = vmax.xlane.f32.xlu0 %v540
  %v542 = vpop.xlane.xlu0 %541
  %v543 = vsel %vm539, %v475, -inf
  %544 = vmax.xlane.f32.xlu0 %v543
  %v545 = vpop.xlane.xlu0 %544
  %v546 = vsel %vm539, %v476, -inf
  %547 = vmax.xlane.f32.xlu0 %v546
  %v548 = vpop.xlane.xlu0 %547
  %v549 = vsel %vm539, %v477, -inf
  %550 = vmax.xlane.f32.xlu0 %v549
  %v551 = vpop.xlane.xlu0 %550
  %vm552 = vcmask 7168
  %v553 = vsel %vm552, %v491, %v535
  %v554 = vsel %vm552, %v492, %v536
  %v555 = vsel %vm552, %v493, %v537
  %v556 = vsel %vm552, %v494, %v538
  %v557 = vsel %vm552, %v497, %v542
  %v558 = vsel %vm552, %v500, %v545
  %v559 = vsel %vm552, %v503, %v548
  %v560 = vsel %vm552, %v506, %v551
  %v561 = vld [vmem:[%s5] sm:$0x1]
  %v562 = vpack.c.bf16 %v554, %v553
  %v563 = vpack.c.bf16 %v556, %v555
  %vm564 = vcmask 261120
  %v566 = vsel %vm564, %v561, 0
  %568 = vmatpush.bf16.msra.mxu0 0
  %569 = vmatpush.bf16.msra.mxu0 0
  %570 = vmatpush.bf16.msra.mxu0 0
  %571 = vmatpush.bf16.msra.mxu0 0
  %572 = vmatpush.bf16.msra.mxu0 0
  %573 = vmatpush.bf16.msra.mxu0 0
  %574 = vmatpush.bf16.msra.mxu0 %v563
  %575 = vmatpush.bf16.msra.mxu0 %v562
  %576 = vmatmul.bf16.gmra.mxu0 %v566
  %v577 = vpop.f32.mrf.mxu0
  %v578 = vadd.f32 0.0, %v577
  %v579 = vpop.f32.mrf.mxu0
  %580 = vdwg.mxu0
  %v581 = vmax.f32 %v578, 0.0
  %v582 = vld [vmem:[%s6] sm:$0xf]
  %v583 = vld [vmem:[%s6 + $0x4] sm:$0xf]
  %v584 = vld [vmem:[%s6 + $0x8] sm:$0xf]
  %v585 = vld [vmem:[%s6 + $0xc] sm:$0xf]
  %v586 = vpack.c.bf16 %v581, %v581
  %v587 = vpack.c.bf16 %v558, %v557
  %v588 = vpack.c.bf16 %v560, %v559
  %589 = vmatpush.bf16.msra.mxu0 0
  %590 = vmatpush.bf16.msra.mxu0 0
  %591 = vmatpush.bf16.msra.mxu0 0
  %592 = vmatpush.bf16.msra.mxu0 0
  %593 = vmatpush.bf16.msra.mxu0 0
  %594 = vmatpush.bf16.msra.mxu0 0
  %595 = vmatpush.bf16.msra.mxu0 %v588
  %596 = vmatpush.bf16.msra.mxu0 %v587
  %597 = vmatmul.bf16.gmra.mxu0 %v566
  %v598 = vpop.f32.mrf.mxu0
  %v599 = vadd.f32 0.0, %v598
  %v600 = vpop.f32.mrf.mxu0
  %601 = vdwg.mxu0
  %v602 = vmax.f32 %v599, 0.0
  %v603 = vpack.c.bf16 %v602, %v602
  %v608 = vunpack.c.l.b16 %v582
  %v609 = vunpack.c.l.b16 %v583
  %v610 = vunpack.c.l.b16 %v584
  %v611 = vunpack.c.l.b16 %v585
  %v612 = vpack.c.b16 %v609, %v608
  %v613 = vpack.c.b16 %v611, %v610
  %vm614 = vcmask 15360
  %v616 = vsel %vm614, %v612, 0
  %v619 = vsel %vm614, %v613, 0
  %vm621 = vcmask 1040384
  %v623 = vsel %vm621, %v603, 0
  %625 = vmatpush.bf16.msra.mxu0 0
  %626 = vmatpush.bf16.msra.mxu0 0
  %627 = vmatpush.bf16.msra.mxu0 0
  %628 = vmatpush.bf16.msra.mxu0 0
  %629 = vmatpush.bf16.msra.mxu0 0
  %630 = vmatpush.bf16.msra.mxu0 0
  %631 = vmatpush.bf16.msra.mxu0 0
  %632 = vmatpush.bf16.msra.mxu0 %v623
  %633 = vmatmul.bf16.gmra.mxu0 %v616
  %v634 = vpop.f32.mrf.mxu0
  %v635 = vadd.f32 0.0, %v634
  %v636 = vpop.f32.mrf.mxu0
  %v637 = vadd.f32 0.0, %v636
  %638 = vmatmul.bf16.gmra.mxu0 %v619
  %v639 = vpop.f32.mrf.mxu0
  %v640 = vadd.f32 0.0, %v639
  %v641 = vpop.f32.mrf.mxu0
  %v642 = vadd.f32 0.0, %v641
  %643 = vdwg.mxu0
  %v645 = vsel %vm621, %v586, 0
  %647 = vmatpush.bf16.msra.mxu0 0
  %648 = vmatpush.bf16.msra.mxu0 0
  %649 = vmatpush.bf16.msra.mxu0 0
  %650 = vmatpush.bf16.msra.mxu0 0
  %651 = vmatpush.bf16.msra.mxu0 0
  %652 = vmatpush.bf16.msra.mxu0 0
  %653 = vmatpush.bf16.msra.mxu0 0
  %654 = vmatpush.bf16.msra.mxu0 %v645
  %655 = vmatmul.bf16.gmra.mxu0 %v616
  %v656 = vpop.f32.mrf.mxu0
  %v657 = vadd.f32 %v635, %v656
  %v658 = vpop.f32.mrf.mxu0
  %v659 = vadd.f32 %v637, %v658
  %660 = vmatmul.bf16.gmra.mxu0 %v619
  %v661 = vpop.f32.mrf.mxu0
  %v662 = vadd.f32 %v640, %v661
  %v663 = vpop.f32.mrf.mxu0
  %v664 = vadd.f32 %v642, %v663
  %665 = vdwg.mxu0
  %v666 = vsub.f32 0.0, %v657
  %v667 = vsub.f32 0.0, %v659
  %v668 = vsub.f32 0.0, %v662
  %v669 = vsub.f32 0.0, %v664
  %v670 = vmul.f32 %v666, 1.442695
  %v671 = vpow.pop %v670
  %v672 = vmul.f32 %v667, 1.442695
  %v673 = vpow.pop %v672
  %v674 = vmul.f32 %v668, 1.442695
  %v675 = vpow.pop %v674
  %v676 = vmul.f32 %v669, 1.442695
  %v677 = vpow.pop %v676
  %v678 = vadd.f32 %v671, 1.0
  %v679 = vadd.f32 %v673, 1.0
  %v680 = vadd.f32 %v675, 1.0
  %v681 = vadd.f32 %v677, 1.0
  %v682 = vrcp.pop %v678
  %v683 = vmul.f32 %v678, %v682
  %v684 = vsub.f32 1.0, %v683
  %v685 = vmul.f32 %v682, %v684
  %v686 = vadd.f32 %v682, %v685
  %vm687 = vweird.f32 %v678
  %vm688 = vweird.f32 %v682
  %vm689 = vmor %vm687, %vm688
  %v690 = vsel %vm689, %v682, %v686
  %v691 = vand.u32 2147483647, %v678
  %vm692 = vcmp.eq.f32.partialorder %v691, 8.507059e+37
  %v693 = vand.u32 %v678, 2147483648
  %v694 = vor.u32 1.1754944e-38, %v693
  %v695 = vsel %vm692, %v694, %v690
  %v696 = vmul.f32 1.0, %v695
  %v697 = vrcp.pop %v679
  %v698 = vmul.f32 %v679, %v697
  %v699 = vsub.f32 1.0, %v698
  %v700 = vmul.f32 %v697, %v699
  %v701 = vadd.f32 %v697, %v700
  %vm702 = vweird.f32 %v679
  %vm703 = vweird.f32 %v697
  %vm704 = vmor %vm702, %vm703
  %v705 = vsel %vm704, %v697, %v701
  %v706 = vand.u32 2147483647, %v679
  %vm707 = vcmp.eq.f32.partialorder %v706, 8.507059e+37
  %v708 = vand.u32 %v679, 2147483648
  %v709 = vor.u32 1.1754944e-38, %v708
  %v710 = vsel %vm707, %v709, %v705
  %v711 = vmul.f32 1.0, %v710
  %v712 = vrcp.pop %v680
  %v713 = vmul.f32 %v680, %v712
  %v714 = vsub.f32 1.0, %v713
  %v715 = vmul.f32 %v712, %v714
  %v716 = vadd.f32 %v712, %v715
  %vm717 = vweird.f32 %v680
  %vm718 = vweird.f32 %v712
  %vm719 = vmor %vm717, %vm718
  %v720 = vsel %vm719, %v712, %v716
  %v721 = vand.u32 2147483647, %v680
  %vm722 = vcmp.eq.f32.partialorder %v721, 8.507059e+37
  %v723 = vand.u32 %v680, 2147483648
  %v724 = vor.u32 1.1754944e-38, %v723
  %v725 = vsel %vm722, %v724, %v720
  %v726 = vmul.f32 1.0, %v725
  %v727 = vrcp.pop %v681
  %v728 = vmul.f32 %v681, %v727
  %v729 = vsub.f32 1.0, %v728
  %v730 = vmul.f32 %v727, %v729
  %v731 = vadd.f32 %v727, %v730
  %vm732 = vweird.f32 %v681
  %vm733 = vweird.f32 %v727
  %vm734 = vmor %vm732, %vm733
  %v735 = vsel %vm734, %v727, %v731
  %v736 = vand.u32 2147483647, %v681
  %vm737 = vcmp.eq.f32.partialorder %v736, 8.507059e+37
  %v738 = vand.u32 %v681, 2147483648
  %v739 = vor.u32 1.1754944e-38, %v738
  %v740 = vsel %vm737, %v739, %v735
  %v741 = vmul.f32 1.0, %v740
  %743 = vset.pattern.permute.xlu0 0
  %744 = vperm.xlu0 %743, %v696
  %v745 = vpop.permute.xlu0 %744
  %748 = vset.pattern.permute.xlu0 0
  %749 = vperm.xlu0 %748, %v711
  %v750 = vpop.permute.xlu0 %749
  %753 = vset.pattern.permute.xlu0 0
  %754 = vperm.xlu0 %753, %v726
  %v755 = vpop.permute.xlu0 %754
  %758 = vset.pattern.permute.xlu0 0
  %759 = vperm.xlu0 %758, %v741
  %v760 = vpop.permute.xlu0 %759
  %v762 = vmul.f32 %v474, %v745
  %v763 = vmul.f32 %v475, %v750
  %v764 = vmul.f32 %v476, %v755
  %v765 = vmul.f32 %v477, %v760
  %766 = vset.pattern.permute.xlu0 1
  %767 = vperm.xlu0 %766, %v696
  %v768 = vpop.permute.xlu0 %767
  %770 = vset.pattern.permute.xlu0 1
  %771 = vperm.xlu0 %770, %v711
  %v772 = vpop.permute.xlu0 %771
  %774 = vset.pattern.permute.xlu0 1
  %775 = vperm.xlu0 %774, %v726
  %v776 = vpop.permute.xlu0 %775
  %778 = vset.pattern.permute.xlu0 1
  %779 = vperm.xlu0 %778, %v741
  %v780 = vpop.permute.xlu0 %779
  %v782 = vmul.f32 %v474, %v768
  %v783 = vmul.f32 %v475, %v772
  %v784 = vmul.f32 %v476, %v776
  %v785 = vmul.f32 %v477, %v780
  %v786 = vsel %vm478, %v762, %v782
  %v787 = vsel %vm478, %v763, %v783
  %v788 = vsel %vm478, %v764, %v784
  %v789 = vsel %vm478, %v765, %v785
  %v790 = vadd.f32 %v786, %v787
  %v791 = vadd.f32 %v790, %v788
  %v792 = vadd.f32 %v791, %v789
  %v793 = vrot.slane %v792, 4
  %v794 = vadd.f32 %v792, %v793
  %v795 = vrot.slane %v794, 2
  %v796 = vadd.f32 %v794, %v795
  %v797 = vrot.slane %v796, 1
  %v798 = vadd.f32 %v796, %v797
  %v799 = vmul.f32 %v798, 0.03125
  %v800 = vmax.f32 %v786, %v787
  %v801 = vmax.f32 %v788, %v789
  %v802 = vmax.f32 %v800, %v801
  %v803 = vrot.slane %v802, 4
  %v804 = vmax.f32 %v802, %v803
  %v805 = vrot.slane %v804, 2
  %v806 = vmax.f32 %v804, %v805
  %v807 = vrot.slane %v806, 1
  %v808 = vmax.f32 %v806, %v807
  %v809 = vsel %vm621, %v799, %v808
  %810 = vrot.lane.b32.xlu0 %v809, 9
  %v811 = vpop.permute.xlu0 %810
  %v812 = vld [vmem:[%s7] sm:$0x3]
  %v813 = vmul.f32 %v812, %v811
  %v814 = vadd.f32 %v813, 0.0
  %815 = vrot.lane.b32.xlu0 %v809, 8
  %v816 = vpop.permute.xlu0 %815
  %s817 = scalar_lea.vmem %s7, 2
  %v818 = vld [vmem:[%s817] sm:$0x3]
  %v819 = vmul.f32 %v818, %v816
  %v820 = vadd.f32 %v814, %v819
  %821 = vrot.lane.b32.xlu0 %v809, 7
  %v822 = vpop.permute.xlu0 %821
  %s823 = scalar_lea.vmem %s7, 4
  %v824 = vld [vmem:[%s823] sm:$0x3]
  %v825 = vmul.f32 %v824, %v822
  %v826 = vadd.f32 %v820, %v825
  %827 = vrot.lane.b32.xlu0 %v809, 1
  %v828 = vpop.permute.xlu0 %827
  %s829 = scalar_lea.vmem %s7, 6
  %v830 = vld [vmem:[%s829] sm:$0x3]
  %v831 = vmul.f32 %v830, %v828
  %v832 = vadd.f32 %v826, %v831
  %s833 = scalar_lea.vmem %s7, 8
  %v834 = vld [vmem:[%s833] sm:$0x3]
  %v835 = vmul.f32 %v834, %v809
  %v836 = vadd.f32 %v832, %v835
  %837 = vrot.lane.b32.xlu0 %v809, 127
  %v838 = vpop.permute.xlu0 %837
  %s839 = scalar_lea.vmem %s7, 10
  %v840 = vld [vmem:[%s839] sm:$0x3]
  %v841 = vmul.f32 %v840, %v838
  %v842 = vadd.f32 %v836, %v841
  %843 = vrot.lane.b32.xlu0 %v809, 121
  %v844 = vpop.permute.xlu0 %843
  %s845 = scalar_lea.vmem %s7, 12
  %v846 = vld [vmem:[%s845] sm:$0x3]
  %v847 = vmul.f32 %v846, %v844
  %v848 = vadd.f32 %v842, %v847
  %849 = vrot.lane.b32.xlu0 %v809, 120
  %v850 = vpop.permute.xlu0 %849
  %s851 = scalar_lea.vmem %s7, 14
  %v852 = vld [vmem:[%s851] sm:$0x3]
  %v853 = vmul.f32 %v852, %v850
  %v854 = vadd.f32 %v848, %v853
  %855 = vrot.lane.b32.xlu0 %v809, 119
  %v856 = vpop.permute.xlu0 %855
  %s857 = scalar_lea.vmem %s7, 16
  %v858 = vld [vmem:[%s857] sm:$0x3]
  %v859 = vmul.f32 %v858, %v856
  %v860 = vadd.f32 %v854, %v859
  %v862 = vrot.slane %v860, 1
  %v864 = vadd.f32 %v860, %v862
  %v865 = vsub.f32 0.0, %v864
  %v866 = vmul.f32 %v865, 1.442695
  %v867 = vpow.pop %v866
  %v868 = vadd.f32 %v867, 1.0
  %v869 = vrcp.pop %v868
  %v870 = vmul.f32 %v868, %v869
  %v871 = vsub.f32 1.0, %v870
  %v872 = vmul.f32 %v869, %v871
  %v873 = vadd.f32 %v869, %v872
  %vm874 = vweird.f32 %v868
  %vm875 = vweird.f32 %v869
  %vm876 = vmor %vm874, %vm875
  %v877 = vsel %vm876, %v869, %v873
  %v878 = vand.u32 2147483647, %v868
  %vm879 = vcmp.eq.f32.partialorder %v878, 8.507059e+37
  %v880 = vand.u32 %v868, 2147483648
  %v881 = vor.u32 1.1754944e-38, %v880
  %v882 = vsel %vm879, %v881, %v877
  %v883 = vmul.f32 1.0, %v882
  %v884 = vperm.slane %v883, 0
  %v885 = vmul.f32 %v786, %v884
  %v886 = vmul.f32 %v787, %v884
  %v887 = vmul.f32 %v788, %v884
  %v888 = vmul.f32 %v789, %v884
  %v889 = vld [vmem:[%s8] sm:$0xf]
  %v890 = vld [vmem:[%s8 + $0x4] sm:$0xf]
  %v891 = vpack.c.bf16 %v886, %v885
  %v892 = vpack.c.bf16 %v888, %v887
  %v893 = vld [vmem:[%s9] sm:$0xff]
  %v894 = vld [vmem:[%s9 + $0x8] sm:$0xff]
  %896 = vset.pattern.permute.xlu0 0
  %897 = vperm.xlu0 %896, %v893
  %v898 = vpop.permute.xlu0 %897
  %901 = vset.pattern.permute.xlu0 0
  %902 = vperm.xlu0 %901, %v894
  %v903 = vpop.permute.xlu0 %902
  %v907 = vunpack.c.l.b16 %v889
  %v908 = vunpack.c.l.b16 %v890
  %v909 = vpack.c.b16 %v908, %v907
  %v911 = vsel %vm564, %v909, 0
  %913 = vmatpush.bf16.msra.mxu0 0
  %914 = vmatpush.bf16.msra.mxu0 0
  %915 = vmatpush.bf16.msra.mxu0 0
  %916 = vmatpush.bf16.msra.mxu0 0
  %917 = vmatpush.bf16.msra.mxu0 0
  %918 = vmatpush.bf16.msra.mxu0 0
  %919 = vmatpush.bf16.msra.mxu0 %v892
  %920 = vmatpush.bf16.msra.mxu0 %v891
  %921 = vmatmul.bf16.gmra.mxu0 %v911
  %v922 = vpop.f32.mrf.mxu0
  %v923 = vadd.f32 %v898, %v922
  %v924 = vpop.f32.mrf.mxu0
  %v925 = vadd.f32 %v903, %v924
  %926 = vdwg.mxu0
  %v927 = vmax.f32 %v923, 0.0
  %v928 = vmax.f32 %v925, 0.0
  %929 = vst [vmem:[%s10] sm:$0xff] %v927
  %930 = vst [vmem:[%s10 + $0x8] sm:$0xff] %v928
  // Predicated region
  $region42: #{stm_renet_blockd_forward.1} parent=0 // pred_check
    _
  $region43: #{stm_renet_blockd_forward.1} parent=0 // pred_check_branch
    %932 = sbr.rel (0) target = $region45
  $region44: #{stm_renet_blockd_forward.1} parent=0 // pred_region
    _
  $region45: #{stm_renet_blockd_forward.1} parent=0 // pred_fallthru
    _
  // Predicated region
  $region46: #{stm_renet_blockd_forward.1} parent=0 // pred_check
    _
  $region47: #{stm_renet_blockd_forward.1} parent=0 // pred_check_branch
    %934 = sbr.rel (0) target = $region49
  $region48: #{stm_renet_blockd_forward.1} parent=0 // pred_region
    _
  $region49: #{stm_renet_blockd_forward.1} parent=0 // pred_fallthru
    _

</llo_original>
